<compile_context>
chip_gen: v7x
topology: tpu7x:2x2x1
jax: 0.10.0
libtpu: 0.0.40
codegen_flags: <defaults>
</compile_context>

<pallas_src>
import jax
import jax.numpy as jnp
from jax.experimental import pallas as pl
from jax.experimental.pallas import tpu as pltpu

_LANE = 128
_SUBLANE = 8


def _round_up(v, m):
    return (v + m - 1) // m * m


def _ss_packed_kernel(x_ref, u_ref, wa_ref, wb_ref, out_ref):
    """out = x_packed @ kron(I, A^T) + u_packed @ kron(I, B^T).

    All operands are VMEM tiles.  The contraction width is 128 so a single
    jnp.dot keeps the MXU fed; x/out tiles are exactly 128 lanes wide and the
    u tile's lane width equals its full extent, so all DMAs and stores are
    unmasked / lane-dense.
    """
    dx = jnp.dot(x_ref[...], wa_ref[...], preferred_element_type=jnp.float32)
    dx = dx + jnp.dot(u_ref[...], wb_ref[...], preferred_element_type=jnp.float32)
    out_ref[...] = dx.astype(out_ref.dtype)


def f_ss_forward(x, u, A, B, *, tile_rows=None):
    """Pallas equivalent of f_ss_class.forward.

    x: (T, n_x) or (n_x,) ; u: (T, n_u) or (n_u,)
    A: (n_x, n_x) ; B: (n_x, n_u)          (PyTorch parameter shapes)
    tile_rows: optional cap on the number of PACKED rows per grid step
               (each packed row = 128 // n_x timesteps).
    """
    A = A.astype(jnp.float32)
    B = B.astype(jnp.float32)

    # Single-step path: a 1-row kernel launch is pure latency; do it inline.
    if x.ndim == 1:
        dx = A @ x.astype(jnp.float32) + B @ u.astype(jnp.float32)
        return dx.astype(x.dtype)

    T = x.shape[0]
    n_x = A.shape[0]
    n_u = B.shape[1]

    # Lane-dense kron packing needs n_x to divide the 128-lane width.
    if n_x > _LANE or _LANE % n_x != 0:
        # TODO(synk): direct tiled Pallas path for large / awkward n_x; the
        # module's intended regime is tiny n_x, so plain XLA suffices here.
        return x @ A.T + u @ B.T

    pack = _LANE // n_x          # timesteps folded into one 128-lane row
    lane_x = pack * n_x          # == 128
    lane_u = pack * n_u

    # Pad T to a multiple of the pack factor (zero rows -> zero dx rows).
    t_pad = _round_up(T, pack)
    if t_pad != T:
        x = jnp.pad(x, ((0, t_pad - T), (0, 0)))
        u = jnp.pad(u, ((0, t_pad - T), (0, 0)))
    g = t_pad // pack

    # Free contiguous reshapes: time stays the leading (sublane) axis, the
    # folded features fill the 128 lanes.
    xp = x.reshape(g, lane_x)
    up = u.reshape(g, lane_u)

    # Trace-time block-diagonal weights: one wide matmul applies A^T / B^T
    # independently to every folded timestep.
    eye = jnp.eye(pack, dtype=jnp.float32)
    wa = jnp.kron(eye, A.T)      # (lane_x, lane_x) == (128, 128)
    wb = jnp.kron(eye, B.T)      # (lane_u, lane_x)

    # ---- Tile-size selection from the per-generation VMEM budget ----------
    try:
        vmem_cap = pltpu.get_tpu_info().vmem_capacity_bytes
    except Exception:
        vmem_cap = 64 << 20      # conservative (v7x-sized) fallback
    itemsize = 4                 # f32 activations
    per_row = (lane_x + lane_u + lane_x) * itemsize      # x + u + out bytes/row
    budget = vmem_cap // 2       # double-buffered activation tiles use <=half
    tile_cap = max(_SUBLANE, (budget // (2 * per_row)) // _SUBLANE * _SUBLANE)
    if tile_rows is not None:
        tile_cap = min(tile_cap, max(_SUBLANE, tile_rows // _SUBLANE * _SUBLANE))
    # Keep >=2 grid steps on large inputs so v7x's two TensorCores both work.
    if g > 1024:
        tile_cap = min(tile_cap, _round_up(pl.cdiv(g, 2), _SUBLANE))
    tg = min(tile_cap, g)
    if tg != g and tg % _SUBLANE != 0:   # (8,128) rule: multiple of 8 or full extent
        tg = max(_SUBLANE, tg // _SUBLANE * _SUBLANE)
    grid = (pl.cdiv(g, tg),)

    weight_bytes = (lane_x * lane_x + lane_u * lane_x) * itemsize
    needed = 2 * tg * per_row + weight_bytes + (4 << 20)
    vmem_limit = int(min(int(vmem_cap * 0.9), max(needed, 32 << 20)))

    out_packed = pl.pallas_call(
        _ss_packed_kernel,
        out_shape=jax.ShapeDtypeStruct((g, lane_x), x.dtype),
        grid_spec=pltpu.PrefetchScalarGridSpec(
            num_scalar_prefetch=0,
            grid=grid,
            in_specs=[
                pl.BlockSpec((tg, lane_x), lambda i: (i, 0)),      # packed x
                pl.BlockSpec((tg, lane_u), lambda i: (i, 0)),      # packed u
                pl.BlockSpec((lane_x, lane_x), lambda i: (0, 0)),  # kron(I, A^T), resident
                pl.BlockSpec((lane_u, lane_x), lambda i: (0, 0)),  # kron(I, B^T), resident
            ],
            out_specs=pl.BlockSpec((tg, lane_x), lambda i: (i, 0)),
        ),
        compiler_params=pltpu.CompilerParams(
            dimension_semantics=("parallel",),
            vmem_limit_bytes=vmem_limit,
        ),
    )(xp, up, wa, wb)

    dx = out_packed.reshape(t_pad, n_x)
    if t_pad != T:
        dx = dx[:T]
    return dx


def _reference(x, u, A, B):
    """Plain-JAX reference of the PyTorch forward."""
    if x.ndim == 1:
        return A @ x + B @ u
    return x @ A.T + u @ B.T


if __name__ == "__main__":
    key = jax.random.PRNGKey(0)
    kx, ku, ka, kb = jax.random.split(key, 4)

    n_x, n_u = 4, 2
    A = jax.random.normal(ka, (n_x, n_x), dtype=jnp.float32)
    B = jax.random.normal(kb, (n_x, n_u), dtype=jnp.float32)

    # (1) Batched path with a multi-step grid (tile_rows=8 packed rows ->
    #     grid of 3 blocks, last one partial).
    T = 640
    x = jax.random.normal(kx, (T, n_x), dtype=jnp.float32)
    u = jax.random.normal(ku, (T, n_u), dtype=jnp.float32)
    dx = jax.block_until_ready(f_ss_forward(x, u, A, B, tile_rows=8))
    assert dx.shape == (T, n_x)
    assert jnp.allclose(dx, _reference(x, u, A, B), atol=1e-5, rtol=1e-5), \
        "batched (grid) mismatch"

    # (2) Batched path where T is not a multiple of the pack factor (padding).
    T2 = 100
    x2 = jax.random.normal(kx, (T2, n_x), dtype=jnp.float32)
    u2 = jax.random.normal(ku, (T2, n_u), dtype=jnp.float32)
    dx2 = jax.block_until_ready(f_ss_forward(x2, u2, A, B))
    assert dx2.shape == (T2, n_x)
    assert jnp.allclose(dx2, _reference(x2, u2, A, B), atol=1e-5, rtol=1e-5), \
        "padded mismatch"

    # (3) Single-step path (x.ndim == 1) -> plain JAX, no kernel launch.
    dx1 = jax.block_until_ready(f_ss_forward(x[0], u[0], A, B))
    assert dx1.shape == (n_x,)
    assert jnp.allclose(dx1, _reference(x[0], u[0], A, B), atol=1e-5, rtol=1e-5), \
        "single-step mismatch"

    print("KERNEL_OK")
</pallas_src>

<mosaic_0001>
module attributes {stable_mosaic.version = 11 : i64} {
  func.func @_ss_packed_kernel(%arg0: i32, %arg1: memref<8x128xf32, #tpu.memory_space<vmem>>, %arg2: memref<8x64xf32, #tpu.memory_space<vmem>>, %arg3: memref<128x128xf32, #tpu.memory_space<vmem>>, %arg4: memref<64x128xf32, #tpu.memory_space<vmem>>, %arg5: memref<8x128xf32, #tpu.memory_space<vmem>>) attributes {dimension_semantics = [#tpu.dimension_semantics<parallel>], iteration_bounds = array<i64: 3>, scalar_prefetch = 0 : i64, scratch_operands = 0 : i64, tpu.core_type = #tpu.core_type<tc>, window_params = [{transform_indices = @transform_0, window_bounds = array<i64: 8, 128>}, {transform_indices = @transform_1, window_bounds = array<i64: 8, 64>}, {pipeline_mode = #tpu.pipeline_mode<synchronous>, transform_indices = @transform_2, window_bounds = array<i64: 128, 128>}, {pipeline_mode = #tpu.pipeline_mode<synchronous>, transform_indices = @transform_3, window_bounds = array<i64: 64, 128>}, {transform_indices = @transform_4, window_bounds = array<i64: 8, 128>}]} {
    %c0 = arith.constant 0 : index
    %c0_0 = arith.constant 0 : index
    %0 = vector.load %arg1[%c0, %c0_0] : memref<8x128xf32, #tpu.memory_space<vmem>>, vector<8x128xf32>
    %c0_1 = arith.constant 0 : index
    %c0_2 = arith.constant 0 : index
    %1 = vector.load %arg3[%c0_1, %c0_2] : memref<128x128xf32, #tpu.memory_space<vmem>>, vector<128x128xf32>
    %cst = arith.constant dense<0.000000e+00> : vector<8x128xf32>
    %2 = tpu.matmul %0, %1, %cst {dimension_numbers = #tpu.dot_dimension_numbers<[1], [0], [0], [1], [0, 0, 1, 1], [], []>} : vector<8x128xf32>, vector<128x128xf32>, vector<8x128xf32> -> vector<8x128xf32>
    %c0_3 = arith.constant 0 : index
    %c0_4 = arith.constant 0 : index
    %3 = vector.load %arg2[%c0_3, %c0_4] : memref<8x64xf32, #tpu.memory_space<vmem>>, vector<8x64xf32>
    %c0_5 = arith.constant 0 : index
    %c0_6 = arith.constant 0 : index
    %4 = vector.load %arg4[%c0_5, %c0_6] : memref<64x128xf32, #tpu.memory_space<vmem>>, vector<64x128xf32>
    %cst_7 = arith.constant dense<0.000000e+00> : vector<8x128xf32>
    %5 = tpu.matmul %3, %4, %cst_7 {dimension_numbers = #tpu.dot_dimension_numbers<[1], [0], [0], [1], [0, 0, 1, 1], [], []>} : vector<8x64xf32>, vector<64x128xf32>, vector<8x128xf32> -> vector<8x128xf32>
    %6 = arith.addf %2, %5 : vector<8x128xf32>
    %c0_8 = arith.constant 0 : index
    %c0_9 = arith.constant 0 : index
    %7 = vector.load %arg5[%c0_8, %c0_9] : memref<8x128xf32, #tpu.memory_space<vmem>>, vector<8x128xf32>
    tpu.vector_store %arg5[%c0_8, %c0_9], %6 {strides = array<i32>} : memref<8x128xf32, #tpu.memory_space<vmem>>, vector<8x128xf32>,
    return
  }
  func.func @transform_0(%arg0: i32) -> (i32, i32) {
    %c0_i32 = arith.constant 0 : i32
    %c0_i32_0 = arith.constant 0 : i32
    return %arg0, %c0_i32 : i32, i32
  }
  func.func @transform_1(%arg0: i32) -> (i32, i32) {
    %c0_i32 = arith.constant 0 : i32
    %c0_i32_0 = arith.constant 0 : i32
    return %arg0, %c0_i32 : i32, i32
  }
  func.func @transform_2(%arg0: i32) -> (i32, i32) {
    %c0_i32 = arith.constant 0 : i32
    %c0_i32_0 = arith.constant 0 : i32
    %c0_i32_1 = arith.constant 0 : i32
    return %c0_i32, %c0_i32_0 : i32, i32
  }
  func.func @transform_3(%arg0: i32) -> (i32, i32) {
    %c0_i32 = arith.constant 0 : i32
    %c0_i32_0 = arith.constant 0 : i32
    %c0_i32_1 = arith.constant 0 : i32
    return %c0_i32, %c0_i32_0 : i32, i32
  }
  func.func @transform_4(%arg0: i32) -> (i32, i32) {
    %c0_i32 = arith.constant 0 : i32
    %c0_i32_0 = arith.constant 0 : i32
    return %arg0, %c0_i32 : i32, i32
  }
}

</mosaic_0001>

<llo_original>
// kernel: tpu_custom_call.1
$region0: #{tpu_custom_call.1}
  #allocation0 [shape = 'u32[]', space=smem, size = 0x4, offset = 0x4, fixed_abs, tag = 'smem constant byte address 0x4 - core index']
  #allocation1 [shape = 'u32[144,128]{1,0:T(1,128)}', space=vmem, size = 0x12000, scoped, tag = 'internal scratch']
  %s0 = inlined_call_operand.hbm [shape: f32[20,128], index: 0, kind: input, shape index: {}]
  %s1 = inlined_call_operand.hbm [shape: f32[20,64], index: 1, kind: input, shape index: {}]
  %s2 = inlined_call_operand.hbm [shape: f32[128,128], index: 2, kind: input, shape index: {}]
  %s3 = inlined_call_operand.hbm [shape: f32[64,128], index: 3, kind: input, shape index: {}]
  %s4 = inlined_call_operand.hbm [shape: f32[20,128], index: 4, kind: output, shape index: {}]
  %s5 = sld [smem:[#allocation0]]
  $region65: #{tpu_custom_call.1} parent=0
    _
  %s7 = ssub.s32 1, %s5
  %s8 = scalar_select 0, %s7, %s5
  $region1: #{tpu_custom_call.1} parent=0
    #allocation2 [shape = 'u8[8192]{0}', space=vmem, size = 0x2000, scoped, tag = 'input window, operand 0']
    #allocation3 [shape = 's32[2]{0}', space=sflag, size = 0x8, scoped, tag = 'scoped memory for tpu_custom_call.1']
    #allocation4 [shape = 's32[2]{0}', space=sflag, size = 0x8, scoped, tag = 'scoped memory for tpu_custom_call.1']
    #allocation5 [shape = 'u8[8192]{0}', space=vmem, size = 0x2000, scoped, tag = 'input window, operand 1']
    #allocation6 [shape = 's32[2]{0}', space=sflag, size = 0x8, scoped, tag = 'scoped memory for tpu_custom_call.1']
    #allocation7 [shape = 'u8[65536]{0}', space=vmem, size = 0x10000, scoped, tag = 'input window, operand 2, single buffered']
    #allocation8 [shape = 'u8[32768]{0}', space=vmem, size = 0x8000, scoped, tag = 'input window, operand 3, single buffered']
    #allocation9 [shape = 's32[1]{0}', space=sflag, size = 0x4, scoped, tag = 'scoped memory for tpu_custom_call.1']
    #allocation10 [shape = 'u8[8192]{0}', space=vmem, size = 0x2000, scoped, tag = 'output window, operand 0']
    %9 = vsyncpa [#allocation3], 0
    %s10 = scalar_lea.sflag [#allocation3], 1
    %11 = vsyncpa %s10, 0
    %12 = vsyncpa [#allocation6], 0
    %s13 = scalar_lea.sflag [#allocation6], 1
    %14 = vsyncpa %s13, 0
    %15 = vsyncpa [#allocation9], 0
    %16 = vsyncpa [#allocation4], 0
    %s17 = scalar_lea.sflag [#allocation4], 1
    %18 = vsyncpa %s17, 0
    loop: start=0, step=1, limit=5
    $region2: #{tpu_custom_call.1} parent=1 // loop_pre_header
      _
    $region3: #{tpu_custom_call.1} parent=1 // loop_header
      %s20 = sphi 0, %s24
      %p21 = scmp.ge.s32.totalorder %s20, 5
      %s30 = sphi 0, %s32
      %s33 = sphi 0, %s30
      %s34 = sphi 0, %s33
      %s50 = sphi 0, %s34
      %s56 = sphi 0, %s58
      %s59 = sphi 0, %s56
      %s60 = sphi 0, %s59
      %s76 = sphi 0, %s60
      %s80 = sphi 0, %s80
      %s82 = sphi 0, %s80
      %s83 = sphi 0, %s82
      %s97 = sphi 0, %s83
      %s101 = sphi 0, %s101
      %s103 = sphi 0, %s101
      %s104 = sphi 0, %s103
      %s118 = sphi 0, %s104
      %s124 = sphi 0, %s126
      %s127 = sphi 0, %s124
      %s128 = sphi 0, %s127
      %s144 = sphi 0, %s128
    $region4: #{tpu_custom_call.1} parent=1 // loop_header_branch
      %23 = sbr.rel (%p21) target = $region8
    $region5: #{tpu_custom_call.1} parent=1 // loop_body
      %s25 = ssub.s32 %s20, 1
      %s26 = ssub.s32 %s20, 2
      %s27 = sadd.s32 %s20, 1
      %s28 = ssub.s32 %s20, %s27
      %p29 = scmp.eq.s32.totalorder %s28, 0
      %s31 = sadd.s32 %s30, 1
      %s32 = scalar_select %p29, %s30, %s31
      %p35 = pneg %p29
      %p36 = scmp.eq.s32.totalorder %s20, 2
      %p37 = por %p35, %p36
      %p38 = scmp.ne.s32.totalorder %s30, %s33
      %p39 = scmp.eq.s32.totalorder %s20, 0
      %p40 = por %p38, %p39
      %p41 = scmp.ne.s32.totalorder %s30, %s33
      %p42 = scmp.eq.s32.totalorder %s25, 2
      %p43 = por %p41, %p42
      %p44 = scmp.ne.s32.totalorder %s33, %s34
      %p45 = scmp.eq.s32.totalorder %s25, 0
      %p46 = por %p44, %p45
      %p47 = scmp.ne.s32.totalorder %s33, %s34
      %p48 = scmp.eq.s32.totalorder %s26, 2
      %p49 = por %p47, %p48
      %p51 = scmp.ne.s32.totalorder %s34, %s50
      %p52 = scmp.eq.s32.totalorder %s26, 0
      %p53 = por %p51, %p52
      %s54 = ssub.s32 %s20, %s27
      %p55 = scmp.eq.s32.totalorder %s54, 0
      %s57 = sadd.s32 %s56, 1
      %s58 = scalar_select %p55, %s56, %s57
      %p61 = pneg %p55
      %p62 = scmp.eq.s32.totalorder %s20, 2
      %p63 = por %p61, %p62
      %p64 = scmp.ne.s32.totalorder %s56, %s59
      %p65 = scmp.eq.s32.totalorder %s20, 0
      %p66 = por %p64, %p65
      %p67 = scmp.ne.s32.totalorder %s56, %s59
      %p68 = scmp.eq.s32.totalorder %s25, 2
      %p69 = por %p67, %p68
      %p70 = scmp.ne.s32.totalorder %s59, %s60
      %p71 = scmp.eq.s32.totalorder %s25, 0
      %p72 = por %p70, %p71
      %p73 = scmp.ne.s32.totalorder %s59, %s60
      %p74 = scmp.eq.s32.totalorder %s26, 2
      %p75 = por %p73, %p74
      %p77 = scmp.ne.s32.totalorder %s60, %s76
      %p78 = scmp.eq.s32.totalorder %s26, 0
      %p79 = por %p77, %p78
      %s81 = sadd.s32 %s80, 1
      %p84 = scmp.eq.s32.totalorder %s20, 2
      %p85 = scmp.ne.s32.totalorder %s80, %s82
      %p86 = scmp.eq.s32.totalorder %s20, 0
      %p87 = por %p85, %p86
      %p88 = scmp.ne.s32.totalorder %s80, %s82
      %p89 = scmp.eq.s32.totalorder %s25, 2
      %p90 = por %p88, %p89
      %p91 = scmp.ne.s32.totalorder %s82, %s83
      %p92 = scmp.eq.s32.totalorder %s25, 0
      %p93 = por %p91, %p92
      %p94 = scmp.ne.s32.totalorder %s82, %s83
      %p95 = scmp.eq.s32.totalorder %s26, 2
      %p96 = por %p94, %p95
      %p98 = scmp.ne.s32.totalorder %s83, %s97
      %p99 = scmp.eq.s32.totalorder %s26, 0
      %p100 = por %p98, %p99
      %s102 = sadd.s32 %s101, 1
      %p105 = scmp.eq.s32.totalorder %s20, 2
      %p106 = scmp.ne.s32.totalorder %s101, %s103
      %p107 = scmp.eq.s32.totalorder %s20, 0
      %p108 = por %p106, %p107
      %p109 = scmp.ne.s32.totalorder %s101, %s103
      %p110 = scmp.eq.s32.totalorder %s25, 2
      %p111 = por %p109, %p110
      %p112 = scmp.ne.s32.totalorder %s103, %s104
      %p113 = scmp.eq.s32.totalorder %s25, 0
      %p114 = por %p112, %p113
      %p115 = scmp.ne.s32.totalorder %s103, %s104
      %p116 = scmp.eq.s32.totalorder %s26, 2
      %p117 = por %p115, %p116
      %p119 = scmp.ne.s32.totalorder %s104, %s118
      %p120 = scmp.eq.s32.totalorder %s26, 0
      %p121 = por %p119, %p120
      %s122 = ssub.s32 %s20, %s27
      %p123 = scmp.eq.s32.totalorder %s122, 0
      %s125 = sadd.s32 %s124, 1
      %s126 = scalar_select %p123, %s124, %s125
      %p129 = pneg %p123
      %p130 = scmp.eq.s32.totalorder %s20, 2
      %p131 = por %p129, %p130
      %p132 = scmp.ne.s32.totalorder %s124, %s127
      %p133 = scmp.eq.s32.totalorder %s20, 0
      %p134 = por %p132, %p133
      %p135 = scmp.ne.s32.totalorder %s124, %s127
      %p136 = scmp.eq.s32.totalorder %s25, 2
      %p137 = por %p135, %p136
      %p138 = scmp.ne.s32.totalorder %s127, %s128
      %p139 = scmp.eq.s32.totalorder %s25, 0
      %p140 = por %p138, %p139
      %p141 = scmp.ne.s32.totalorder %s127, %s128
      %p142 = scmp.eq.s32.totalorder %s26, 2
      %p143 = por %p141, %p142
      %p145 = scmp.ne.s32.totalorder %s128, %s144
      %p146 = scmp.eq.s32.totalorder %s26, 0
      %p147 = por %p145, %p146
      %p148 = scmp.le.s32.totalorder 1, %s20
      %p149 = scmp.lt.s32.totalorder %s20, 4
      %p150 = pnand %p148, %p149
      %p151 = pneg %p150
      // Predicated region
      $region9: #{tpu_custom_call.1} parent=5 // pred_check
        _
      $region10: #{tpu_custom_call.1} parent=5 // pred_check_branch
        %153 = sbr.rel (%p150) target = $region12
      $region11: #{tpu_custom_call.1} parent=5 // pred_region
        %s154 = ssub.s32 %s20, 1
        // Predicated region
        $region13: #{tpu_custom_call.1} parent=11 // pred_check
          %p155 = pneg %p93
        $region14: #{tpu_custom_call.1} parent=11 // pred_check_branch
          %157 = sbr.rel (%p155) target = $region16
        $region15: #{tpu_custom_call.1} parent=11 // pred_region
          %s159 = ssub.s32 2048, 2048
          %160 = vsyncadd [#allocation6], %s159
          %s161 = sshll.u32 [#allocation7], 4
          %s162 = int_to_ptr.vmem [resolvable:$true] %s161
          %167 = dma.hbm_to_vmem [thread:$0]  %s2, 2048, %s162, [#allocation6], 128, 128, 8
        $region16: #{tpu_custom_call.1} parent=11 // pred_fallthru
          _
        // Predicated region
        $region17: #{tpu_custom_call.1} parent=11 // pred_check
          %p168 = pneg %p114
        $region18: #{tpu_custom_call.1} parent=11 // pred_check_branch
          %170 = sbr.rel (%p168) target = $region20
        $region19: #{tpu_custom_call.1} parent=11 // pred_region
          %s172 = ssub.s32 1024, 1024
          %173 = vsyncadd [#allocation9], %s172
          %s174 = sshll.u32 [#allocation8], 4
          %s175 = int_to_ptr.vmem [resolvable:$true] %s174
          %180 = dma.hbm_to_vmem [thread:$0]  %s3, 1024, %s175, [#allocation9], 128, 128, 8
        $region20: #{tpu_custom_call.1} parent=11 // pred_fallthru
          _
      $region12: #{tpu_custom_call.1} parent=5 // pred_fallthru
        _
      %p181 = scmp.lt.s32.totalorder %s20, 3
      // Predicated region
      $region21: #{tpu_custom_call.1} parent=5 // pred_check
        %p182 = pneg %p181
      $region22: #{tpu_custom_call.1} parent=5 // pred_check_branch
        %184 = sbr.rel (%p182) target = $region24
      $region23: #{tpu_custom_call.1} parent=5 // pred_region
        // Predicated region
        $region25: #{tpu_custom_call.1} parent=23 // pred_check
          %p185 = pneg %p40
        $region26: #{tpu_custom_call.1} parent=23 // pred_check_branch
          %187 = sbr.rel (%p185) target = $region28
        $region27: #{tpu_custom_call.1} parent=23 // pred_region
          %s188 = sand.u32 %s30, 1
          %s189 = scalar_lea.sflag [#allocation3], %s188
          %s190 = sand.u32 %s30, 1
          %s191 = smul.addr %s190, 8
          %s192 = scalar_lea.vmem [#allocation2], %s191
          %s194 = ssub.s32 128, 128
          %195 = vsyncadd %s189, %s194
          %s196 = smul.addr %s20, 128
          %s197 = scalar_lea.hbm %s0, %s196
          %s199 = sshll.u32 %s192, 4
          %s200 = int_to_ptr.vmem [resolvable:$true] %s199
          %202 = dma.hbm_to_vmem [thread:$0]  %s197, 128, %s200, %s189
        $region28: #{tpu_custom_call.1} parent=23 // pred_fallthru
          _
        // Predicated region
        $region29: #{tpu_custom_call.1} parent=23 // pred_check
          %p203 = pneg %p66
        $region30: #{tpu_custom_call.1} parent=23 // pred_check_branch
          %205 = sbr.rel (%p203) target = $region32
        $region31: #{tpu_custom_call.1} parent=23 // pred_region
          %s206 = sand.u32 %s20, 1
          %s207 = scalar_lea.sflag [#allocation6], %s206
          %s208 = sand.u32 %s56, 1
          %s209 = smul.addr %s208, 8
          %s210 = scalar_lea.vmem [#allocation5], %s209
          %s212 = ssub.s32 128, 128
          %213 = vsyncadd %s207, %s212
          %s214 = smul.addr %s20, 128
          %s215 = scalar_lea.hbm %s1, %s214
          %s217 = sshll.u32 %s210, 4
          %s218 = int_to_ptr.vmem [resolvable:$true] %s217
          %220 = dma.hbm_to_vmem [thread:$0]  %s215, 128, %s218, %s207
        $region32: #{tpu_custom_call.1} parent=23 // pred_fallthru
          _
      $region24: #{tpu_custom_call.1} parent=5 // pred_fallthru
        _
      %p221 = scmp.le.s32.totalorder 1, %s20
      %p222 = scmp.lt.s32.totalorder %s20, 4
      %p223 = pnand %p221, %p222
      %p224 = pneg %p223
      // Predicated region
      $region33: #{tpu_custom_call.1} parent=5 // pred_check
        _
      $region34: #{tpu_custom_call.1} parent=5 // pred_check_branch
        %226 = sbr.rel (%p223) target = $region36
      $region35: #{tpu_custom_call.1} parent=5 // pred_region
        %s227 = ssub.s32 %s20, 1
        %s228 = sand.u32 %s33, 1
        %s229 = scalar_lea.sflag [#allocation3], %s228
        %s230 = sand.u32 %s33, 1
        %s231 = smul.addr %s230, 8
        %s232 = scalar_lea.vmem [#allocation2], %s231
        // Predicated region
        $region37: #{tpu_custom_call.1} parent=35 // pred_check
          %p233 = pneg %p46
        $region38: #{tpu_custom_call.1} parent=35 // pred_check_branch
          %235 = sbr.rel (%p233) target = $region40
        $region39: #{tpu_custom_call.1} parent=35 // pred_region
          %236 = dma.done %s229, 128
        $region40: #{tpu_custom_call.1} parent=35 // pred_fallthru
          _
        %s237 = sand.u32 %s25, 1
        %s238 = scalar_lea.sflag [#allocation6], %s237
        %s239 = sand.u32 %s59, 1
        %s240 = smul.addr %s239, 8
        %s241 = scalar_lea.vmem [#allocation5], %s240
        // Predicated region
        $region41: #{tpu_custom_call.1} parent=35 // pred_check
          %p242 = pneg %p72
        $region42: #{tpu_custom_call.1} parent=35 // pred_check_branch
          %244 = sbr.rel (%p242) target = $region44
        $region43: #{tpu_custom_call.1} parent=35 // pred_region
          %245 = dma.done %s238, 128
        $region44: #{tpu_custom_call.1} parent=35 // pred_fallthru
          _
        // Predicated region
        $region45: #{tpu_custom_call.1} parent=35 // pred_check
          %p246 = pneg %p93
        $region46: #{tpu_custom_call.1} parent=35 // pred_check_branch
          %248 = sbr.rel (%p246) target = $region48
        $region47: #{tpu_custom_call.1} parent=35 // pred_region
          %249 = dma.done [#allocation6], 2048
        $region48: #{tpu_custom_call.1} parent=35 // pred_fallthru
          _
        // Predicated region
        $region49: #{tpu_custom_call.1} parent=35 // pred_check
          %p250 = pneg %p114
        $region50: #{tpu_custom_call.1} parent=35 // pred_check_branch
          %252 = sbr.rel (%p250) target = $region52
        $region51: #{tpu_custom_call.1} parent=35 // pred_region
          %253 = dma.done [#allocation9], 1024
        $region52: #{tpu_custom_call.1} parent=35 // pred_fallthru
          _
        %s254 = sand.u32 %s33, 1
        %s255 = scalar_lea.sflag [#allocation3], %s254
        %s256 = sand.u32 %s33, 1
        %s257 = smul.addr %s256, 8
        %s258 = scalar_lea.vmem [#allocation2], %s257
        %p259 = pneg %p46
        %p260 = pneg %p43
        %s261 = sand.u32 %s25, 1
        %s262 = scalar_lea.sflag [#allocation6], %s261
        %s263 = sand.u32 %s59, 1
        %s264 = smul.addr %s263, 8
        %s265 = scalar_lea.vmem [#allocation5], %s264
        %p266 = pneg %p72
        %p267 = pneg %p69
        %p268 = pneg %p93
        %p269 = pneg %p90
        %p270 = pneg %p114
        %p271 = pneg %p111
        %p272 = pneg %p140
        %p273 = pneg %p137
        %s274 = sand.u32 %s127, 1
        %s275 = scalar_lea.sflag [#allocation4], %s274
        %s276 = sand.u32 %s127, 1
        %s277 = smul.addr %s276, 8
        %s278 = scalar_lea.vmem [#allocation10], %s277
        %v279 = vld [vmem:[%s232] sm:$0xff]
        %v280 = vld [vmem:[#allocation7] sm:$0xff]
        %v281 = vld [vmem:[#allocation7 + $0x8] sm:$0xff]
        %v282 = vld [vmem:[#allocation7 + $0x10] sm:$0xff]
        %v283 = vld [vmem:[#allocation7 + $0x18] sm:$0xff]
        %v284 = vld [vmem:[#allocation7 + $0x20] sm:$0xff]
        %v285 = vld [vmem:[#allocation7 + $0x28] sm:$0xff]
        %v286 = vld [vmem:[#allocation7 + $0x30] sm:$0xff]
        %v287 = vld [vmem:[#allocation7 + $0x38] sm:$0xff]
        %v288 = vld [vmem:[#allocation7 + $0x40] sm:$0xff]
        %v289 = vld [vmem:[#allocation7 + $0x48] sm:$0xff]
        %v290 = vld [vmem:[#allocation7 + $0x50] sm:$0xff]
        %v291 = vld [vmem:[#allocation7 + $0x58] sm:$0xff]
        %v292 = vld [vmem:[#allocation7 + $0x60] sm:$0xff]
        %v293 = vld [vmem:[#allocation7 + $0x68] sm:$0xff]
        %v294 = vld [vmem:[#allocation7 + $0x70] sm:$0xff]
        %v295 = vld [vmem:[#allocation7 + $0x78] sm:$0xff]
        %v296 = vld [vmem:[%s241] sm:$0xff]
        %v297 = vld [vmem:[#allocation8] sm:$0xff]
        %v298 = vld [vmem:[#allocation8 + $0x8] sm:$0xff]
        %v299 = vld [vmem:[#allocation8 + $0x10] sm:$0xff]
        %v300 = vld [vmem:[#allocation8 + $0x18] sm:$0xff]
        %v301 = vld [vmem:[#allocation8 + $0x20] sm:$0xff]
        %v302 = vld [vmem:[#allocation8 + $0x28] sm:$0xff]
        %v303 = vld [vmem:[#allocation8 + $0x30] sm:$0xff]
        %v304 = vld [vmem:[#allocation8 + $0x38] sm:$0xff]
        %vm305 = vcmask 523264
        %v307 = vsel %vm305, %v296, 0
        %309 = vmatprep.subr.mxu0 0.0
        %310 = vmatpush1.msra.mxu0 %v297
        %311 = vmatprep.subr.mxu0 0.0
        %312 = vmatpush1.msra.mxu0 %v298
        %313 = vmatprep.subr.mxu0 0.0
        %314 = vmatpush1.msra.mxu0 %v299
        %315 = vmatprep.subr.mxu0 0.0
        %316 = vmatpush1.msra.mxu0 %v300
        %317 = vmatprep.subr.mxu0 0.0
        %318 = vmatpush1.msra.mxu0 %v301
        %319 = vmatprep.subr.mxu0 0.0
        %320 = vmatpush1.msra.mxu0 %v302
        %321 = vmatprep.subr.mxu0 0.0
        %322 = vmatpush1.msra.mxu0 %v303
        %323 = vmatprep.subr.mxu0 0.0
        %324 = vmatpush1.msra.mxu0 %v304
        %325 = vmatprep.subr.mxu0 0.0
        %326 = vmatpush1.msra.mxu0 0.0
        %327 = vmatprep.subr.mxu0 0.0
        %328 = vmatpush1.msra.mxu0 0.0
        %329 = vmatprep.subr.mxu0 0.0
        %330 = vmatpush1.msra.mxu0 0.0
        %331 = vmatprep.subr.mxu0 0.0
        %332 = vmatpush1.msra.mxu0 0.0
        %333 = vmatprep.subr.mxu0 0.0
        %334 = vmatpush1.msra.mxu0 0.0
        %335 = vmatprep.subr.mxu0 0.0
        %336 = vmatpush1.msra.mxu0 0.0
        %337 = vmatprep.subr.mxu0 0.0
        %338 = vmatpush1.msra.mxu0 0.0
        %339 = vmatprep.subr.mxu0 0.0
        %340 = vmatpush1.msra.mxu0 0.0
        %341 = vmatprep.subr.mxu0 0.0
        %342 = vmatpush1.msra.mxu0 0.0
        %343 = vmatprep.subr.mxu0 0.0
        %344 = vmatpush1.msra.mxu0 0.0
        %345 = vmatprep.subr.mxu0 0.0
        %346 = vmatpush1.msra.mxu0 0.0
        %347 = vmatprep.subr.mxu0 0.0
        %348 = vmatpush1.msra.mxu0 0.0
        %349 = vmatprep.subr.mxu0 0.0
        %350 = vmatpush1.msra.mxu0 0.0
        %351 = vmatprep.subr.mxu0 0.0
        %352 = vmatpush1.msra.mxu0 0.0
        %353 = vmatprep.subr.mxu0 0.0
        %354 = vmatpush1.msra.mxu0 0.0
        %355 = vmatprep.subr.mxu0 0.0
        %356 = vmatpush1.msra.mxu0 0.0
        %357 = vmatprep.subr.mxu0 0.0
        %358 = vmatpush1.msra.mxu0 0.0
        %359 = vmatprep.subr.mxu0 0.0
        %360 = vmatpush1.msra.mxu0 0.0
        %361 = vmatprep.subr.mxu0 0.0
        %362 = vmatpush1.msra.mxu0 0.0
        %363 = vmatprep.subr.mxu0 0.0
        %364 = vmatpush1.msra.mxu0 0.0
        %365 = vmatprep.subr.mxu0 0.0
        %366 = vmatpush1.msra.mxu0 0.0
        %367 = vmatprep.subr.mxu0 0.0
        %368 = vmatpush1.msra.mxu0 0.0
        %369 = vmatprep.subr.mxu0 0.0
        %370 = vmatpush1.msra.mxu0 0.0
        %371 = vmatprep.subr.mxu0 0.0
        %372 = vmatpush1.msra.mxu0 0.0
        %373 = vmatprep.mubr.f32.mxu0 0.0
        %374 = vmatmul.mubr.f32.gmra.mrb[0].mxu0 %v307
        %v375 = vpop.f32.mrb[0].mxu0
        %v376 = vadd.f32 0.0, %v375
        %v377 = vpop.f32.mrb[0].mxu0
        %378 = vdwg.mxu0
        %379 = vmatprep.subr.mxu0 0.0
        %380 = vmatpush1.msra.mxu0 %v280
        %381 = vmatprep.subr.mxu0 0.0
        %382 = vmatpush1.msra.mxu0 %v281
        %383 = vmatprep.subr.mxu0 0.0
        %384 = vmatpush1.msra.mxu0 %v282
        %385 = vmatprep.subr.mxu0 0.0
        %386 = vmatpush1.msra.mxu0 %v283
        %387 = vmatprep.subr.mxu0 0.0
        %388 = vmatpush1.msra.mxu0 %v284
        %389 = vmatprep.subr.mxu0 0.0
        %390 = vmatpush1.msra.mxu0 %v285
        %391 = vmatprep.subr.mxu0 0.0
        %392 = vmatpush1.msra.mxu0 %v286
        %393 = vmatprep.subr.mxu0 0.0
        %394 = vmatpush1.msra.mxu0 %v287
        %395 = vmatprep.subr.mxu0 0.0
        %396 = vmatpush1.msra.mxu0 %v288
        %397 = vmatprep.subr.mxu0 0.0
        %398 = vmatpush1.msra.mxu0 %v289
        %399 = vmatprep.subr.mxu0 0.0
        %400 = vmatpush1.msra.mxu0 %v290
        %401 = vmatprep.subr.mxu0 0.0
        %402 = vmatpush1.msra.mxu0 %v291
        %403 = vmatprep.subr.mxu0 0.0
        %404 = vmatpush1.msra.mxu0 %v292
        %405 = vmatprep.subr.mxu0 0.0
        %406 = vmatpush1.msra.mxu0 %v293
        %407 = vmatprep.subr.mxu0 0.0
        %408 = vmatpush1.msra.mxu0 %v294
        %409 = vmatprep.subr.mxu0 0.0
        %410 = vmatpush1.msra.mxu0 %v295
        %411 = vmatprep.subr.mxu0 0.0
        %412 = vmatpush1.msra.mxu0 0.0
        %413 = vmatprep.subr.mxu0 0.0
        %414 = vmatpush1.msra.mxu0 0.0
        %415 = vmatprep.subr.mxu0 0.0
        %416 = vmatpush1.msra.mxu0 0.0
        %417 = vmatprep.subr.mxu0 0.0
        %418 = vmatpush1.msra.mxu0 0.0
        %419 = vmatprep.subr.mxu0 0.0
        %420 = vmatpush1.msra.mxu0 0.0
        %421 = vmatprep.subr.mxu0 0.0
        %422 = vmatpush1.msra.mxu0 0.0
        %423 = vmatprep.subr.mxu0 0.0
        %424 = vmatpush1.msra.mxu0 0.0
        %425 = vmatprep.subr.mxu0 0.0
        %426 = vmatpush1.msra.mxu0 0.0
        %427 = vmatprep.subr.mxu0 0.0
        %428 = vmatpush1.msra.mxu0 0.0
        %429 = vmatprep.subr.mxu0 0.0
        %430 = vmatpush1.msra.mxu0 0.0
        %431 = vmatprep.subr.mxu0 0.0
        %432 = vmatpush1.msra.mxu0 0.0
        %433 = vmatprep.subr.mxu0 0.0
        %434 = vmatpush1.msra.mxu0 0.0
        %435 = vmatprep.subr.mxu0 0.0
        %436 = vmatpush1.msra.mxu0 0.0
        %437 = vmatprep.subr.mxu0 0.0
        %438 = vmatpush1.msra.mxu0 0.0
        %439 = vmatprep.subr.mxu0 0.0
        %440 = vmatpush1.msra.mxu0 0.0
        %441 = vmatprep.subr.mxu0 0.0
        %442 = vmatpush1.msra.mxu0 0.0
        %443 = vmatprep.mubr.f32.mxu0 0.0
        %444 = vmatmul.mubr.f32.gmra.mrb[0].mxu0 %v279
        %v445 = vpop.f32.mrb[0].mxu0
        %v446 = vadd.f32 %v376, %v445
        %v447 = vpop.f32.mrb[0].mxu0
        %448 = vdwg.mxu0
        %449 = vst [vmem:[%s278] sm:$0xff] %v446
        %s450 = sand.u32 %s127, 1
        %s451 = scalar_lea.sflag [#allocation4], %s450
        %s452 = sand.u32 %s127, 1
        %s453 = smul.addr %s452, 8
        %s454 = scalar_lea.vmem [#allocation10], %s453
        // Predicated region
        $region53: #{tpu_custom_call.1} parent=35 // pred_check
          %p455 = pneg %p137
        $region54: #{tpu_custom_call.1} parent=35 // pred_check_branch
          %457 = sbr.rel (%p455) target = $region56
        $region55: #{tpu_custom_call.1} parent=35 // pred_region
          %s459 = ssub.s32 128, 128
          %460 = vsyncadd %s451, %s459
          %s461 = smul.addr %s25, 128
          %s462 = scalar_lea.hbm %s4, %s461
          %s464 = sshll.u32 %s454, 4
          %s465 = int_to_ptr.vmem [resolvable:$true] %s464
          %467 = dma.vmem_to_hbm [thread:$0]  %s465, 128, %s462, %s451
        $region56: #{tpu_custom_call.1} parent=35 // pred_fallthru
          _
      $region36: #{tpu_custom_call.1} parent=5 // pred_fallthru
        _
      %p468 = scmp.le.s32.totalorder 2, %s20
      // Predicated region
      $region57: #{tpu_custom_call.1} parent=5 // pred_check
        %p469 = pneg %p468
      $region58: #{tpu_custom_call.1} parent=5 // pred_check_branch
        %471 = sbr.rel (%p469) target = $region60
      $region59: #{tpu_custom_call.1} parent=5 // pred_region
        %s472 = ssub.s32 %s20, 2
        // Predicated region
        $region61: #{tpu_custom_call.1} parent=59 // pred_check
          %p473 = pneg %p143
        $region62: #{tpu_custom_call.1} parent=59 // pred_check_branch
          %475 = sbr.rel (%p473) target = $region64
        $region63: #{tpu_custom_call.1} parent=59 // pred_region
          %s476 = sand.u32 %s128, 1
          %s477 = scalar_lea.sflag [#allocation4], %s476
          %s478 = sand.u32 %s128, 1
          %s479 = smul.addr %s478, 8
          %s480 = scalar_lea.vmem [#allocation10], %s479
          %481 = dma.done %s477, 128
        $region64: #{tpu_custom_call.1} parent=59 // pred_fallthru
          _
      $region60: #{tpu_custom_call.1} parent=5 // pred_fallthru
        _
    $region6: #{tpu_custom_call.1} parent=1 // loop_footer
      %s24 = sadd.s32 1, %s20
    $region7: #{tpu_custom_call.1} parent=1 // loop_footer_branch
      %19 = sbr.rel target = $region3
    $region8: #{tpu_custom_call.1} parent=1 // loop_exit
      _
    %482 = vsyncpa [#allocation3], 1
    %s483 = scalar_lea.sflag [#allocation3], 1
    %484 = vsyncpa %s483, 1
    %485 = vsyncpa [#allocation6], 1
    %s486 = scalar_lea.sflag [#allocation6], 1
    %487 = vsyncpa %s486, 1
    %488 = vsyncpa [#allocation9], 1
    %489 = vsyncpa [#allocation4], 1
    %s490 = scalar_lea.sflag [#allocation4], 1
    %491 = vsyncpa %s490, 1

</llo_original>
